<compile_context>
chip_gen: v7x
topology: tpu7x:2x2x1
jax: 0.10.0
libtpu: 0.0.40
codegen_flags: <defaults>
</compile_context>

<pallas_src>
import jax
import jax.numpy as jnp
from jax.experimental import pallas as pl
from jax.experimental.pallas import tpu as pltpu


def _round_up(n, m):
    return ((n + m - 1) // m) * m


def _gelu(x):
    # tanh-approx GELU: the transcendental runs on the EUP (its own VLIW slot)
    # instead of a long erf polynomial occupying VALU slots.
    return jax.nn.gelu(x, approximate=True)


def _mlp_kernel(xt_ref,
                w1_ref, b1_ref,
                w2_ref, b2_ref,
                w3_ref, b3_ref,
                w4_ref, b4_ref,
                o_ref):
    """One batch tile of the (dim+1) -> H -> H -> H -> dim MLP (all on MXU)."""
    dim = o_ref.shape[1]

    # ---- layer 1: [x, t] @ W1 + b1 on the MXU (K zero-padded to Kp) -------
    xt = xt_ref[...].astype(jnp.bfloat16)                     # (TB, Kp)
    h = jnp.dot(xt, w1_ref[...],
                preferred_element_type=jnp.float32) + b1_ref[...]
    h = _gelu(h.astype(jnp.bfloat16))                         # bf16 EUP GELU

    # ---- layers 2,3: 256x256 MXU matmuls, bf16 operands, f32 accumulate ---
    h = jnp.dot(h, w2_ref[...],
                preferred_element_type=jnp.float32) + b2_ref[...]
    h = _gelu(h.astype(jnp.bfloat16))
    h = jnp.dot(h, w3_ref[...],
                preferred_element_type=jnp.float32) + b3_ref[...]
    h = _gelu(h.astype(jnp.bfloat16))

    # ---- output head: matmul against lane-padded W4, store only dim lanes --
    out = jnp.dot(h, w4_ref[...],
                  preferred_element_type=jnp.float32) + b4_ref[...]  # (TB, n_pad)
    o_ref[...] = out[:, :dim].astype(o_ref.dtype)


def boltzmann_flow_forward(x, t, params, *, block_b=4096):
    """Forward pass of BoltzmannFlow: velocity field v(x, t).

    x: (B, dim) float32
    t: scalar, (), (1,), or (B,) float32 -> broadcast to (B, 1)
    params: dict of weights/biases (see init_params)
    """
    B, dim = x.shape
    H = params["w2"].shape[0]
    K = dim + 1
    Kp = _round_up(K, 8)                       # MXU-friendly contraction depth
    n_pad = _round_up(max(dim, 128), 128)      # lane-padded head width (matmul only)

    t = jnp.asarray(t, jnp.float32).reshape(-1)
    if t.shape[0] == 1:
        t = jnp.broadcast_to(t, (B,))
    t = t.reshape(B, 1).astype(jnp.float32)
    x = x.astype(jnp.float32)

    # Single pipelined input: cat([x, t]) padded to Kp columns.
    xt = jnp.concatenate([x, t], axis=-1)                      # (B, K) f32
    if Kp != K:
        xt = jnp.pad(xt, ((0, 0), (0, Kp - K)))

    # Batch tiling: minimize tail padding; force >=2 grid steps when possible
    # so the "parallel" axis can shard across both v7x TensorCores.
    n_blocks = max(1, pl.cdiv(B, block_b))
    if n_blocks == 1 and B >= 16:
        n_blocks = 2
    tb = _round_up(pl.cdiv(B, n_blocks), 8)
    b_pad = _round_up(B, tb)
    if b_pad != B:
        xt = jnp.pad(xt, ((0, b_pad - B), (0, 0)))
    grid = (b_pad // tb,)

    # Zero-pad layer-1 rows and head columns (exact-zero contributions).
    w1p = jnp.pad(params["w1"], ((0, Kp - K), (0, 0)))          # bf16 (Kp, H)
    w4p = jnp.pad(params["w4"], ((0, 0), (0, n_pad - dim)))     # bf16 (H, n_pad)
    b4p = jnp.pad(params["b4"], ((0, 0), (0, n_pad - dim)))     # f32  (1, n_pad)

    def row_spec(shape):
        return pl.BlockSpec(shape, lambda i: (i, 0))

    def const_spec(shape):
        return pl.BlockSpec(shape, lambda i: (0, 0))

    weight_bytes = (
        (params["b1"].size + params["b2"].size + params["b3"].size + b4p.size) * 4
        + (w1p.size + params["w2"].size + params["w3"].size + w4p.size) * 2)
    flops = 2 * b_pad * (Kp * H + H * H + H * H + H * n_pad)
    cost = pl.CostEstimate(
        flops=int(flops),
        transcendentals=int(3 * b_pad * H),
        bytes_accessed=int(xt.size * 4 + b_pad * dim * 4 + weight_bytes))

    out = pl.pallas_call(
        _mlp_kernel,
        out_shape=jax.ShapeDtypeStruct((b_pad, dim), jnp.float32),
        grid=grid,
        in_specs=[
            row_spec((tb, Kp)),             # xt tile (pipelined)
            const_spec((Kp, H)),            # w1 (resident)
            const_spec((1, H)),             # b1
            const_spec((H, H)),             # w2
            const_spec((1, H)),             # b2
            const_spec((H, H)),             # w3
            const_spec((1, H)),             # b3
            const_spec((H, n_pad)),         # w4 (lane-padded, matmul only)
            const_spec((1, n_pad)),         # b4 (lane-padded)
        ],
        out_specs=row_spec((tb, dim)),      # narrow writeback: (tb, dim)
        compiler_params=pltpu.CompilerParams(
            dimension_semantics=("parallel",)),
        cost_estimate=cost,
    )(xt,
      w1p, params["b1"],
      params["w2"], params["b2"],
      params["w3"], params["b3"],
      w4p, b4p)

    return out if b_pad == B else out[:B]


def init_params(key, dim, hidden_dim=256):
    """Deterministic synthetic parameters (shapes match MLP(dim, hidden_dim, num_layers=4)).

    Weights are stored bf16 (MXU-native); biases stay f32.
    """
    ks = jax.random.split(key, 8)

    def lin(kw, kb, fan_in, fan_out):
        bound = 1.0 / jnp.sqrt(fan_in)
        w = jax.random.uniform(kw, (fan_in, fan_out), jnp.float32, -bound, bound)
        b = jax.random.uniform(kb, (1, fan_out), jnp.float32, -bound, bound)
        return w, b

    w1, b1 = lin(ks[0], ks[1], dim + 1, hidden_dim)   # cat([x, t]) layer
    w2, b2 = lin(ks[2], ks[3], hidden_dim, hidden_dim)
    w3, b3 = lin(ks[4], ks[5], hidden_dim, hidden_dim)
    w4, b4 = lin(ks[6], ks[7], hidden_dim, dim)

    return {
        "w1": w1.astype(jnp.bfloat16), "b1": b1,      # (dim+1, H), (1, H)
        "w2": w2.astype(jnp.bfloat16), "b2": b2,
        "w3": w3.astype(jnp.bfloat16), "b3": b3,
        "w4": w4.astype(jnp.bfloat16), "b4": b4,      # (H, dim), (1, dim)
    }


def _reference_forward(x, t, params):
    """Pure-JAX reference with the same numeric format (bf16 MXU + bf16 tanh GELU)."""
    B = x.shape[0]
    t = jnp.asarray(t, jnp.float32).reshape(-1)
    if t.shape[0] == 1:
        t = jnp.broadcast_to(t, (B,))
    t = t.reshape(B, 1)
    xt = jnp.concatenate([x, t], axis=-1)
    h = jnp.dot(xt.astype(jnp.bfloat16), params["w1"],
                preferred_element_type=jnp.float32) + params["b1"]
    h = _gelu(h.astype(jnp.bfloat16))
    h = jnp.dot(h, params["w2"], preferred_element_type=jnp.float32) + params["b2"]
    h = _gelu(h.astype(jnp.bfloat16))
    h = jnp.dot(h, params["w3"], preferred_element_type=jnp.float32) + params["b3"]
    h = _gelu(h.astype(jnp.bfloat16))
    return jnp.dot(h, params["w4"], preferred_element_type=jnp.float32) + params["b4"]


if __name__ == "__main__":
    key = jax.random.PRNGKey(0)
    k_params, k_x, k_t, k_x2 = jax.random.split(key, 4)

    B, dim, hidden = 8, 4, 256
    params = init_params(k_params, dim, hidden_dim=hidden)

    # Case 1: per-sample t vector, single grid step.
    x = jax.random.normal(k_x, (B, dim), jnp.float32)
    t = jax.random.uniform(k_t, (B,), jnp.float32)
    out = jax.block_until_ready(boltzmann_flow_forward(x, t, params))
    ref = _reference_forward(x, t, params)
    assert out.shape == (B, dim), out.shape
    assert jnp.allclose(out, ref, atol=2e-3, rtol=2e-3), (
        float(jnp.max(jnp.abs(out - ref))))

    # Case 2: scalar t (as used in sample()), multi-step grid + batch padding.
    B2 = 20
    x2 = jax.random.normal(k_x2, (B2, dim), jnp.float32)
    t2 = jnp.float32(0.25)
    out2 = jax.block_until_ready(
        boltzmann_flow_forward(x2, t2, params, block_b=8))
    ref2 = _reference_forward(x2, t2, params)
    assert out2.shape == (B2, dim), out2.shape
    assert jnp.allclose(out2, ref2, atol=2e-3, rtol=2e-3), (
        float(jnp.max(jnp.abs(out2 - ref2))))

    print("KERNEL_OK")
</pallas_src>

<mosaic_0001>
module attributes {stable_mosaic.version = 11 : i64} {
  func.func @_mlp_kernel(%arg0: i32, %arg1: memref<8x8xf32, #tpu.memory_space<vmem>>, %arg2: memref<8x256xbf16, #tpu.memory_space<vmem>>, %arg3: memref<1x256xf32, #tpu.memory_space<vmem>>, %arg4: memref<256x256xbf16, #tpu.memory_space<vmem>>, %arg5: memref<1x256xf32, #tpu.memory_space<vmem>>, %arg6: memref<256x256xbf16, #tpu.memory_space<vmem>>, %arg7: memref<1x256xf32, #tpu.memory_space<vmem>>, %arg8: memref<256x128xbf16, #tpu.memory_space<vmem>>, %arg9: memref<1x128xf32, #tpu.memory_space<vmem>>, %arg10: memref<8x4xf32, #tpu.memory_space<vmem>>) attributes {dimension_semantics = [#tpu.dimension_semantics<parallel>], iteration_bounds = array<i64: 1>, scalar_prefetch = 0 : i64, scratch_operands = 0 : i64, tpu.core_type = #tpu.core_type<tc>, window_params = [{transform_indices = @transform_0, window_bounds = array<i64: 8, 8>}, {pipeline_mode = #tpu.pipeline_mode<synchronous>, transform_indices = @transform_1, window_bounds = array<i64: 8, 256>}, {pipeline_mode = #tpu.pipeline_mode<synchronous>, transform_indices = @transform_2, window_bounds = array<i64: 1, 256>}, {pipeline_mode = #tpu.pipeline_mode<synchronous>, transform_indices = @transform_3, window_bounds = array<i64: 256, 256>}, {pipeline_mode = #tpu.pipeline_mode<synchronous>, transform_indices = @transform_4, window_bounds = array<i64: 1, 256>}, {pipeline_mode = #tpu.pipeline_mode<synchronous>, transform_indices = @transform_5, window_bounds = array<i64: 256, 256>}, {pipeline_mode = #tpu.pipeline_mode<synchronous>, transform_indices = @transform_6, window_bounds = array<i64: 1, 256>}, {pipeline_mode = #tpu.pipeline_mode<synchronous>, transform_indices = @transform_7, window_bounds = array<i64: 256, 128>}, {pipeline_mode = #tpu.pipeline_mode<synchronous>, transform_indices = @transform_8, window_bounds = array<i64: 1, 128>}, {transform_indices = @transform_9, window_bounds = array<i64: 8, 4>}]} {
    %c0 = arith.constant 0 : index
    %c0_0 = arith.constant 0 : index
    %0 = vector.load %arg1[%c0, %c0_0] : memref<8x8xf32, #tpu.memory_space<vmem>>, vector<8x8xf32>
    %1 = arith.truncf %0 : vector<8x8xf32> to vector<8x8xbf16>
    %c0_1 = arith.constant 0 : index
    %c0_2 = arith.constant 0 : index
    %2 = vector.load %arg2[%c0_1, %c0_2] : memref<8x256xbf16, #tpu.memory_space<vmem>>, vector<8x256xbf16>
    %cst = arith.constant dense<0.000000e+00> : vector<8x256xf32>
    %3 = tpu.matmul %1, %2, %cst {dimension_numbers = #tpu.dot_dimension_numbers<[1], [0], [0], [1], [0, 0, 1, 1], [], []>} : vector<8x8xbf16>, vector<8x256xbf16>, vector<8x256xf32> -> vector<8x256xf32>
    %c0_3 = arith.constant 0 : index
    %c0_4 = arith.constant 0 : index
    %4 = vector.load %arg3[%c0_3, %c0_4] : memref<1x256xf32, #tpu.memory_space<vmem>>, vector<1x256xf32>
    %5 = vector.broadcast %4 : vector<1x256xf32> to vector<8x256xf32>
    %6 = arith.addf %3, %5 : vector<8x256xf32>
    %7 = arith.truncf %6 : vector<8x256xf32> to vector<8x256xbf16>
    %8 = arith.mulf %7, %7 : vector<8x256xbf16>
    %9 = arith.mulf %7, %8 : vector<8x256xbf16>
    %cst_5 = arith.constant 4.467770e-02 : bf16
    %10 = vector.broadcast %cst_5 : bf16 to vector<8x256xbf16>
    %11 = arith.mulf %10, %9 : vector<8x256xbf16>
    %12 = arith.addf %7, %11 : vector<8x256xbf16>
    %cst_6 = arith.constant 7.968750e-01 : bf16
    %13 = vector.broadcast %cst_6 : bf16 to vector<8x256xbf16>
    %14 = arith.mulf %13, %12 : vector<8x256xbf16>
    %15 = math.tanh %14 : vector<8x256xbf16>
    %cst_7 = arith.constant 1.000000e+00 : bf16
    %16 = vector.broadcast %cst_7 : bf16 to vector<8x256xbf16>
    %17 = arith.addf %16, %15 : vector<8x256xbf16>
    %cst_8 = arith.constant 5.000000e-01 : bf16
    %18 = vector.broadcast %cst_8 : bf16 to vector<8x256xbf16>
    %19 = arith.mulf %18, %17 : vector<8x256xbf16>
    %20 = arith.mulf %7, %19 : vector<8x256xbf16>
    %c0_9 = arith.constant 0 : index
    %c0_10 = arith.constant 0 : index
    %21 = vector.load %arg4[%c0_9, %c0_10] : memref<256x256xbf16, #tpu.memory_space<vmem>>, vector<256x256xbf16>
    %cst_11 = arith.constant dense<0.000000e+00> : vector<8x256xf32>
    %22 = tpu.matmul %20, %21, %cst_11 {dimension_numbers = #tpu.dot_dimension_numbers<[1], [0], [0], [1], [0, 0, 1, 1], [], []>} : vector<8x256xbf16>, vector<256x256xbf16>, vector<8x256xf32> -> vector<8x256xf32>
    %c0_12 = arith.constant 0 : index
    %c0_13 = arith.constant 0 : index
    %23 = vector.load %arg5[%c0_12, %c0_13] : memref<1x256xf32, #tpu.memory_space<vmem>>, vector<1x256xf32>
    %24 = vector.broadcast %23 : vector<1x256xf32> to vector<8x256xf32>
    %25 = arith.addf %22, %24 : vector<8x256xf32>
    %26 = arith.truncf %25 : vector<8x256xf32> to vector<8x256xbf16>
    %27 = arith.mulf %26, %26 : vector<8x256xbf16>
    %28 = arith.mulf %26, %27 : vector<8x256xbf16>
    %cst_14 = arith.constant 4.467770e-02 : bf16
    %29 = vector.broadcast %cst_14 : bf16 to vector<8x256xbf16>
    %30 = arith.mulf %29, %28 : vector<8x256xbf16>
    %31 = arith.addf %26, %30 : vector<8x256xbf16>
    %cst_15 = arith.constant 7.968750e-01 : bf16
    %32 = vector.broadcast %cst_15 : bf16 to vector<8x256xbf16>
    %33 = arith.mulf %32, %31 : vector<8x256xbf16>
    %34 = math.tanh %33 : vector<8x256xbf16>
    %cst_16 = arith.constant 1.000000e+00 : bf16
    %35 = vector.broadcast %cst_16 : bf16 to vector<8x256xbf16>
    %36 = arith.addf %35, %34 : vector<8x256xbf16>
    %cst_17 = arith.constant 5.000000e-01 : bf16
    %37 = vector.broadcast %cst_17 : bf16 to vector<8x256xbf16>
    %38 = arith.mulf %37, %36 : vector<8x256xbf16>
    %39 = arith.mulf %26, %38 : vector<8x256xbf16>
    %c0_18 = arith.constant 0 : index
    %c0_19 = arith.constant 0 : index
    %40 = vector.load %arg6[%c0_18, %c0_19] : memref<256x256xbf16, #tpu.memory_space<vmem>>, vector<256x256xbf16>
    %cst_20 = arith.constant dense<0.000000e+00> : vector<8x256xf32>
    %41 = tpu.matmul %39, %40, %cst_20 {dimension_numbers = #tpu.dot_dimension_numbers<[1], [0], [0], [1], [0, 0, 1, 1], [], []>} : vector<8x256xbf16>, vector<256x256xbf16>, vector<8x256xf32> -> vector<8x256xf32>
    %c0_21 = arith.constant 0 : index
    %c0_22 = arith.constant 0 : index
    %42 = vector.load %arg7[%c0_21, %c0_22] : memref<1x256xf32, #tpu.memory_space<vmem>>, vector<1x256xf32>
    %43 = vector.broadcast %42 : vector<1x256xf32> to vector<8x256xf32>
    %44 = arith.addf %41, %43 : vector<8x256xf32>
    %45 = arith.truncf %44 : vector<8x256xf32> to vector<8x256xbf16>
    %46 = arith.mulf %45, %45 : vector<8x256xbf16>
    %47 = arith.mulf %45, %46 : vector<8x256xbf16>
    %cst_23 = arith.constant 4.467770e-02 : bf16
    %48 = vector.broadcast %cst_23 : bf16 to vector<8x256xbf16>
    %49 = arith.mulf %48, %47 : vector<8x256xbf16>
    %50 = arith.addf %45, %49 : vector<8x256xbf16>
    %cst_24 = arith.constant 7.968750e-01 : bf16
    %51 = vector.broadcast %cst_24 : bf16 to vector<8x256xbf16>
    %52 = arith.mulf %51, %50 : vector<8x256xbf16>
    %53 = math.tanh %52 : vector<8x256xbf16>
    %cst_25 = arith.constant 1.000000e+00 : bf16
    %54 = vector.broadcast %cst_25 : bf16 to vector<8x256xbf16>
    %55 = arith.addf %54, %53 : vector<8x256xbf16>
    %cst_26 = arith.constant 5.000000e-01 : bf16
    %56 = vector.broadcast %cst_26 : bf16 to vector<8x256xbf16>
    %57 = arith.mulf %56, %55 : vector<8x256xbf16>
    %58 = arith.mulf %45, %57 : vector<8x256xbf16>
    %c0_27 = arith.constant 0 : index
    %c0_28 = arith.constant 0 : index
    %59 = vector.load %arg8[%c0_27, %c0_28] : memref<256x128xbf16, #tpu.memory_space<vmem>>, vector<256x128xbf16>
    %cst_29 = arith.constant dense<0.000000e+00> : vector<8x128xf32>
    %60 = tpu.matmul %58, %59, %cst_29 {dimension_numbers = #tpu.dot_dimension_numbers<[1], [0], [0], [1], [0, 0, 1, 1], [], []>} : vector<8x256xbf16>, vector<256x128xbf16>, vector<8x128xf32> -> vector<8x128xf32>
    %c0_30 = arith.constant 0 : index
    %c0_31 = arith.constant 0 : index
    %61 = vector.load %arg9[%c0_30, %c0_31] : memref<1x128xf32, #tpu.memory_space<vmem>>, vector<1x128xf32>
    %62 = vector.broadcast %61 : vector<1x128xf32> to vector<8x128xf32>
    %63 = arith.addf %60, %62 : vector<8x128xf32>
    %64 = vector.extract_strided_slice %63 {offsets = [0, 0], sizes = [8, 4], strides = [1, 1]} : vector<8x128xf32> to vector<8x4xf32>
    %c0_32 = arith.constant 0 : index
    %c0_33 = arith.constant 0 : index
    %65 = vector.load %arg10[%c0_32, %c0_33] : memref<8x4xf32, #tpu.memory_space<vmem>>, vector<8x4xf32>
    tpu.vector_store %arg10[%c0_32, %c0_33], %64 {strides = array<i32>} : memref<8x4xf32, #tpu.memory_space<vmem>>, vector<8x4xf32>,
    return
  }
  func.func @transform_0(%arg0: i32) -> (i32, i32) {
    %c0_i32 = arith.constant 0 : i32
    %c0_i32_0 = arith.constant 0 : i32
    return %arg0, %c0_i32 : i32, i32
  }
  func.func @transform_1(%arg0: i32) -> (i32, i32) {
    %c0_i32 = arith.constant 0 : i32
    %c0_i32_0 = arith.constant 0 : i32
    %c0_i32_1 = arith.constant 0 : i32
    return %c0_i32, %c0_i32_0 : i32, i32
  }
  func.func @transform_2(%arg0: i32) -> (i32, i32) {
    %c0_i32 = arith.constant 0 : i32
    %c0_i32_0 = arith.constant 0 : i32
    %c0_i32_1 = arith.constant 0 : i32
    return %c0_i32, %c0_i32_0 : i32, i32
  }
  func.func @transform_3(%arg0: i32) -> (i32, i32) {
    %c0_i32 = arith.constant 0 : i32
    %c0_i32_0 = arith.constant 0 : i32
    %c0_i32_1 = arith.constant 0 : i32
    return %c0_i32, %c0_i32_0 : i32, i32
  }
  func.func @transform_4(%arg0: i32) -> (i32, i32) {
    %c0_i32 = arith.constant 0 : i32
    %c0_i32_0 = arith.constant 0 : i32
    %c0_i32_1 = arith.constant 0 : i32
    return %c0_i32, %c0_i32_0 : i32, i32
  }
  func.func @transform_5(%arg0: i32) -> (i32, i32) {
    %c0_i32 = arith.constant 0 : i32
    %c0_i32_0 = arith.constant 0 : i32
    %c0_i32_1 = arith.constant 0 : i32
    return %c0_i32, %c0_i32_0 : i32, i32
  }
  func.func @transform_6(%arg0: i32) -> (i32, i32) {
    %c0_i32 = arith.constant 0 : i32
    %c0_i32_0 = arith.constant 0 : i32
    %c0_i32_1 = arith.constant 0 : i32
    return %c0_i32, %c0_i32_0 : i32, i32
  }
  func.func @transform_7(%arg0: i32) -> (i32, i32) {
    %c0_i32 = arith.constant 0 : i32
    %c0_i32_0 = arith.constant 0 : i32
    %c0_i32_1 = arith.constant 0 : i32
    return %c0_i32, %c0_i32_0 : i32, i32
  }
  func.func @transform_8(%arg0: i32) -> (i32, i32) {
    %c0_i32 = arith.constant 0 : i32
    %c0_i32_0 = arith.constant 0 : i32
    %c0_i32_1 = arith.constant 0 : i32
    return %c0_i32, %c0_i32_0 : i32, i32
  }
  func.func @transform_9(%arg0: i32) -> (i32, i32) {
    %c0_i32 = arith.constant 0 : i32
    %c0_i32_0 = arith.constant 0 : i32
    return %arg0, %c0_i32 : i32, i32
  }
}

</mosaic_0001>

<llo_original>
// kernel: tpu_custom_call.1
$region0: #{tpu_custom_call.1}
  #allocation0 [shape = 'u32[]', space=smem, size = 0x4, offset = 0x4, fixed_abs, tag = 'smem constant byte address 0x4 - core index']
  #allocation1 [shape = 'u32[144,128]{1,0:T(1,128)}', space=vmem, size = 0x12000, scoped, tag = 'internal scratch']
  %s0 = inlined_call_operand.hbm [shape: f32[8,8], index: 0, kind: input, shape index: {}]
  %s1 = inlined_call_operand.hbm [shape: bf16[8,256], index: 1, kind: input, shape index: {}]
  %s2 = inlined_call_operand.vmem [shape: f32[1,256], index: 2, kind: input, shape index: {}]
  %s3 = inlined_call_operand.hbm [shape: bf16[256,256], index: 3, kind: input, shape index: {}]
  %s4 = inlined_call_operand.vmem [shape: f32[1,256], index: 4, kind: input, shape index: {}]
  %s5 = inlined_call_operand.hbm [shape: bf16[256,256], index: 5, kind: input, shape index: {}]
  %s6 = inlined_call_operand.vmem [shape: f32[1,256], index: 6, kind: input, shape index: {}]
  %s7 = inlined_call_operand.hbm [shape: bf16[256,128], index: 7, kind: input, shape index: {}]
  %s8 = inlined_call_operand.vmem [shape: f32[1,128], index: 8, kind: input, shape index: {}]
  %s9 = inlined_call_operand.vmem [shape: f32[8,4], index: 9, kind: output, shape index: {}]
  %s10 = sld [smem:[#allocation0]]
  $region66: #{tpu_custom_call.1} parent=0
    _
  %s12 = ssub.s32 1, %s10
  %s13 = scalar_select 0, %s12, %s10
  $region1: #{tpu_custom_call.1} parent=0
    #allocation2 [shape = 'u8[4096]{0}', space=vmem, size = 0x1000, scoped, tag = 'input window, operand 0, single buffered']
    #allocation3 [shape = 's32[1]{0}', space=sflag, size = 0x4, scoped, tag = 'scoped memory for tpu_custom_call.1']
    #allocation4 [shape = 'u8[4096]{0}', space=vmem, size = 0x1000, scoped, tag = 'input window, operand 1, single buffered']
    #allocation5 [shape = 's32[1]{0}', space=sflag, size = 0x4, scoped, tag = 'scoped memory for tpu_custom_call.1']
    #allocation6 [shape = 'u8[131072]{0}', space=vmem, size = 0x20000, scoped, tag = 'input window, operand 3, single buffered']
    #allocation7 [shape = 'u8[131072]{0}', space=vmem, size = 0x20000, scoped, tag = 'input window, operand 5, single buffered']
    #allocation8 [shape = 's32[1]{0}', space=sflag, size = 0x4, scoped, tag = 'scoped memory for tpu_custom_call.1']
    #allocation9 [shape = 'u8[65536]{0}', space=vmem, size = 0x10000, scoped, tag = 'input window, operand 7, single buffered']
    %14 = vsyncpa [#allocation3], 0
    %15 = vsyncpa [#allocation5], 0
    %16 = vsyncpa [#allocation8], 0
    // Predicated region
    $region2: #{tpu_custom_call.1} parent=1 // pred_check
      _
    $region3: #{tpu_custom_call.1} parent=1 // pred_check_branch
      %18 = sbr.rel (0) target = $region5
    $region4: #{tpu_custom_call.1} parent=1 // pred_region
      %s20 = ssub.s32 128, 128
      %21 = vsyncadd [#allocation3], %s20
      %s23 = sshll.u32 [#allocation2], 4
      %s24 = int_to_ptr.vmem [resolvable:$true] %s23
      %26 = dma.hbm_to_vmem [thread:$0]  %s0, 128, %s24, [#allocation3]
    $region5: #{tpu_custom_call.1} parent=1 // pred_fallthru
      _
    // Predicated region
    $region6: #{tpu_custom_call.1} parent=1 // pred_check
      _
    $region7: #{tpu_custom_call.1} parent=1 // pred_check_branch
      %28 = sbr.rel (0) target = $region9
    $region8: #{tpu_custom_call.1} parent=1 // pred_region
      %s30 = ssub.s32 128, 128
      %31 = vsyncadd [#allocation5], %s30
      %s33 = sshll.u32 [#allocation4], 4
      %s34 = int_to_ptr.vmem [resolvable:$true] %s33
      %36 = dma.hbm_to_vmem [thread:$0]  %s1, 128, %s34, [#allocation5]
    $region9: #{tpu_custom_call.1} parent=1 // pred_fallthru
      _
    // Predicated region
    $region10: #{tpu_custom_call.1} parent=1 // pred_check
      _
    $region11: #{tpu_custom_call.1} parent=1 // pred_check_branch
      %38 = sbr.rel (0) target = $region13
    $region12: #{tpu_custom_call.1} parent=1 // pred_region
      _
    $region13: #{tpu_custom_call.1} parent=1 // pred_fallthru
      _
    // Predicated region
    $region14: #{tpu_custom_call.1} parent=1 // pred_check
      _
    $region15: #{tpu_custom_call.1} parent=1 // pred_check_branch
      %40 = sbr.rel (0) target = $region17
    $region16: #{tpu_custom_call.1} parent=1 // pred_region
      %s42 = ssub.s32 4096, 4096
      %43 = vsyncadd [#allocation5], %s42
      %s44 = sshll.u32 [#allocation6], 4
      %s45 = int_to_ptr.vmem [resolvable:$true] %s44
      %50 = dma.hbm_to_vmem [thread:$0]  %s3, 4096, %s45, [#allocation5], 128, 128, 8
    $region17: #{tpu_custom_call.1} parent=1 // pred_fallthru
      _
    // Predicated region
    $region18: #{tpu_custom_call.1} parent=1 // pred_check
      _
    $region19: #{tpu_custom_call.1} parent=1 // pred_check_branch
      %52 = sbr.rel (0) target = $region21
    $region20: #{tpu_custom_call.1} parent=1 // pred_region
      _
    $region21: #{tpu_custom_call.1} parent=1 // pred_fallthru
      _
    // Predicated region
    $region22: #{tpu_custom_call.1} parent=1 // pred_check
      _
    $region23: #{tpu_custom_call.1} parent=1 // pred_check_branch
      %54 = sbr.rel (0) target = $region25
    $region24: #{tpu_custom_call.1} parent=1 // pred_region
      %s56 = ssub.s32 4096, 4096
      %57 = vsyncadd [#allocation8], %s56
      %s58 = sshll.u32 [#allocation7], 4
      %s59 = int_to_ptr.vmem [resolvable:$true] %s58
      %64 = dma.hbm_to_vmem [thread:$0]  %s5, 4096, %s59, [#allocation8], 128, 128, 8
    $region25: #{tpu_custom_call.1} parent=1 // pred_fallthru
      _
    // Predicated region
    $region26: #{tpu_custom_call.1} parent=1 // pred_check
      _
    $region27: #{tpu_custom_call.1} parent=1 // pred_check_branch
      %66 = sbr.rel (0) target = $region29
    $region28: #{tpu_custom_call.1} parent=1 // pred_region
      _
    $region29: #{tpu_custom_call.1} parent=1 // pred_fallthru
      _
    // Predicated region
    $region30: #{tpu_custom_call.1} parent=1 // pred_check
      _
    $region31: #{tpu_custom_call.1} parent=1 // pred_check_branch
      %68 = sbr.rel (0) target = $region33
    $region32: #{tpu_custom_call.1} parent=1 // pred_region
      %s70 = ssub.s32 2048, 2048
      %71 = vsyncadd [#allocation8], %s70
      %s72 = sshll.u32 [#allocation9], 4
      %s73 = int_to_ptr.vmem [resolvable:$true] %s72
      %78 = dma.hbm_to_vmem [thread:$0]  %s7, 2048, %s73, [#allocation8], 64, 64, 4
    $region33: #{tpu_custom_call.1} parent=1 // pred_fallthru
      _
    // Predicated region
    $region34: #{tpu_custom_call.1} parent=1 // pred_check
      _
    $region35: #{tpu_custom_call.1} parent=1 // pred_check_branch
      %80 = sbr.rel (0) target = $region37
    $region36: #{tpu_custom_call.1} parent=1 // pred_region
      _
    $region37: #{tpu_custom_call.1} parent=1 // pred_fallthru
      _
    // Predicated region
    $region38: #{tpu_custom_call.1} parent=1 // pred_check
      _
    $region39: #{tpu_custom_call.1} parent=1 // pred_check_branch
      %82 = sbr.rel (0) target = $region41
    $region40: #{tpu_custom_call.1} parent=1 // pred_region
      %83 = dma.done [#allocation3], 128
    $region41: #{tpu_custom_call.1} parent=1 // pred_fallthru
      _
    // Predicated region
    $region42: #{tpu_custom_call.1} parent=1 // pred_check
      _
    $region43: #{tpu_custom_call.1} parent=1 // pred_check_branch
      %85 = sbr.rel (0) target = $region45
    $region44: #{tpu_custom_call.1} parent=1 // pred_region
      %86 = dma.done [#allocation5], 128
    $region45: #{tpu_custom_call.1} parent=1 // pred_fallthru
      _
    // Predicated region
    $region46: #{tpu_custom_call.1} parent=1 // pred_check
      _
    $region47: #{tpu_custom_call.1} parent=1 // pred_check_branch
      %88 = sbr.rel (0) target = $region49
    $region48: #{tpu_custom_call.1} parent=1 // pred_region
      %89 = dma.done [#allocation5], 4096
    $region49: #{tpu_custom_call.1} parent=1 // pred_fallthru
      _
    // Predicated region
    $region50: #{tpu_custom_call.1} parent=1 // pred_check
      _
    $region51: #{tpu_custom_call.1} parent=1 // pred_check_branch
      %91 = sbr.rel (0) target = $region53
    $region52: #{tpu_custom_call.1} parent=1 // pred_region
      %92 = dma.done [#allocation8], 4096
    $region53: #{tpu_custom_call.1} parent=1 // pred_fallthru
      _
    // Predicated region
    $region54: #{tpu_custom_call.1} parent=1 // pred_check
      _
    $region55: #{tpu_custom_call.1} parent=1 // pred_check_branch
      %94 = sbr.rel (0) target = $region57
    $region56: #{tpu_custom_call.1} parent=1 // pred_region
      %95 = dma.done [#allocation8], 2048
    $region57: #{tpu_custom_call.1} parent=1 // pred_fallthru
      _
    %v101 = vld [vmem:[#allocation2] sm:$0xff]
    %v102 = vpack.c.bf16 %v101, %v101
    %v103 = vld [vmem:[#allocation4] sm:$0xff]
    %v104 = vld [vmem:[%s2] sm:$0x3]
    %v106 = vlaneseq
    %v107 = vshrl.u32 %v106, 7
    %v108 = vsub.s32 0, %v107
    %v109 = vrot.slane %v104, %v108
    %v110 = vlaneseq
    %v111 = vshrl.u32 %v110, 7
    %v112 = vsub.s32 1, %v111
    %v113 = vrot.slane %v104, %v112
    %v117 = vunpack.c.l.b16 %v103
    %v118 = vunpack.c.h.b16 %v103
    %v119 = vpack.c.b16 %v117, %v117
    %v120 = vpack.c.b16 %v118, %v118
    %vm121 = vcmask 64512
    %v123 = vsel %vm121, %v102, 0
    %vm125 = vcmask 1043456
    %v127 = vsel %vm125, %v119, 0
    %v130 = vsel %vm125, %v120, 0
    %132 = vmatprep.subr.bf16.mxu0 %v130
    %133 = vmatpush1.bf16.msra.mxu0 %v127
    %134 = vmatprep.subr.bf16.mxu0 0
    %135 = vmatpush1.bf16.msra.mxu0 0
    %136 = vmatprep.subr.bf16.mxu0 0
    %137 = vmatpush1.bf16.msra.mxu0 0
    %138 = vmatprep.subr.bf16.mxu0 0
    %139 = vmatpush1.bf16.msra.mxu0 0
    %140 = vmatprep.subr.bf16.mxu0 0
    %141 = vmatpush1.bf16.msra.mxu0 0
    %142 = vmatprep.subr.bf16.mxu0 0
    %143 = vmatpush1.bf16.msra.mxu0 0
    %144 = vmatprep.subr.bf16.mxu0 0
    %145 = vmatpush1.bf16.msra.mxu0 0
    %146 = vmatprep.subr.bf16.mxu0 0
    %147 = vmatpush1.bf16.msra.mxu0 0
    %148 = vmatprep.subr.bf16.mxu0 0
    %149 = vmatpush1.bf16.msra.mxu0 0
    %150 = vmatprep.subr.bf16.mxu0 0
    %151 = vmatpush1.bf16.msra.mxu0 0
    %152 = vmatprep.subr.bf16.mxu0 0
    %153 = vmatpush1.bf16.msra.mxu0 0
    %154 = vmatprep.subr.bf16.mxu0 0
    %155 = vmatpush1.bf16.msra.mxu0 0
    %156 = vmatprep.subr.bf16.mxu0 0
    %157 = vmatpush1.bf16.msra.mxu0 0
    %158 = vmatprep.subr.bf16.mxu0 0
    %159 = vmatpush1.bf16.msra.mxu0 0
    %160 = vmatprep.subr.bf16.mxu0 0
    %161 = vmatpush1.bf16.msra.mxu0 0
    %162 = vmatprep.subr.bf16.mxu0 0
    %163 = vmatpush1.bf16.msra.mxu0 0
    %164 = vmatprep.mubr.bf16.mxu0 0
    %165 = vmatmul.mubr.bf16.gmra.mrb[0].mxu0 %v123
    %v166 = vpop.f32.mrb[0].mxu0
    %v167 = vadd.f32 %v109, %v166
    %v168 = vpop.f32.mrb[0].mxu0
    %v169 = vadd.f32 %v113, %v168
    %v170 = vpop.f32.mrb[0].mxu0
    %v171 = vpop.f32.mrb[0].mxu0
    %172 = vdwg.mxu0
    %v173 = vpack.c.bf16 %v167, %v167
    %v174 = vpack.c.bf16 %v169, %v169
    %v175 = vmul.bf16 %v173, %v173
    %v176 = vmul.bf16 %v174, %v174
    %v177 = vmul.bf16 %v173, %v175
    %v178 = vmul.bf16 %v174, %v176
    %v179 = vmul.bf16 %v177, 1027030327
    %v180 = vmul.bf16 %v178, 1027030327
    %v181 = vadd.bf16 %v173, %v179
    %v182 = vadd.bf16 %v174, %v180
    %v183 = vmul.bf16 %v181, 1061961548
    %v184 = vmul.bf16 %v182, 1061961548
    %v185 = vtanh.bf16.pop %v183
    %v186 = vtanh.bf16.pop %v184
    %v187 = vadd.bf16 %v185, 1065369472
    %v188 = vadd.bf16 %v186, 1065369472
    %v189 = vmul.bf16 %v187, 1056980736
    %v190 = vmul.bf16 %v188, 1056980736
    %v191 = vmul.bf16 %v173, %v189
    %v192 = vmul.bf16 %v174, %v190
    %v193 = vld [vmem:[#allocation6] sm:$0xff]
    %v194 = vld [vmem:[#allocation6 + $0x8] sm:$0xff]
    %v195 = vld [vmem:[#allocation6 + $0x10] sm:$0xff]
    %v196 = vld [vmem:[#allocation6 + $0x18] sm:$0xff]
    %v197 = vld [vmem:[#allocation6 + $0x20] sm:$0xff]
    %v198 = vld [vmem:[#allocation6 + $0x28] sm:$0xff]
    %v199 = vld [vmem:[#allocation6 + $0x30] sm:$0xff]
    %v200 = vld [vmem:[#allocation6 + $0x38] sm:$0xff]
    %v201 = vld [vmem:[#allocation6 + $0x40] sm:$0xff]
    %v202 = vld [vmem:[#allocation6 + $0x48] sm:$0xff]
    %v203 = vld [vmem:[#allocation6 + $0x50] sm:$0xff]
    %v204 = vld [vmem:[#allocation6 + $0x58] sm:$0xff]
    %v205 = vld [vmem:[#allocation6 + $0x60] sm:$0xff]
    %v206 = vld [vmem:[#allocation6 + $0x68] sm:$0xff]
    %v207 = vld [vmem:[#allocation6 + $0x70] sm:$0xff]
    %v208 = vld [vmem:[#allocation6 + $0x78] sm:$0xff]
    %v209 = vld [vmem:[#allocation6 + $0x80] sm:$0xff]
    %v210 = vld [vmem:[#allocation6 + $0x88] sm:$0xff]
    %v211 = vld [vmem:[#allocation6 + $0x90] sm:$0xff]
    %v212 = vld [vmem:[#allocation6 + $0x98] sm:$0xff]
    %v213 = vld [vmem:[#allocation6 + $0xa0] sm:$0xff]
    %v214 = vld [vmem:[#allocation6 + $0xa8] sm:$0xff]
    %v215 = vld [vmem:[#allocation6 + $0xb0] sm:$0xff]
    %v216 = vld [vmem:[#allocation6 + $0xb8] sm:$0xff]
    %v217 = vld [vmem:[#allocation6 + $0xc0] sm:$0xff]
    %v218 = vld [vmem:[#allocation6 + $0xc8] sm:$0xff]
    %v219 = vld [vmem:[#allocation6 + $0xd0] sm:$0xff]
    %v220 = vld [vmem:[#allocation6 + $0xd8] sm:$0xff]
    %v221 = vld [vmem:[#allocation6 + $0xe0] sm:$0xff]
    %v222 = vld [vmem:[#allocation6 + $0xe8] sm:$0xff]
    %v223 = vld [vmem:[#allocation6 + $0xf0] sm:$0xff]
    %v224 = vld [vmem:[#allocation6 + $0xf8] sm:$0xff]
    %v225 = vld [vmem:[%s4] sm:$0x3]
    %v227 = vlaneseq
    %v228 = vshrl.u32 %v227, 7
    %v229 = vsub.s32 0, %v228
    %v230 = vrot.slane %v225, %v229
    %v231 = vlaneseq
    %v232 = vshrl.u32 %v231, 7
    %v233 = vsub.s32 1, %v232
    %v234 = vrot.slane %v225, %v233
    %v269 = vunpack.c.l.b16 %v193
    %v270 = vunpack.c.h.b16 %v193
    %v271 = vunpack.c.l.b16 %v194
    %v272 = vunpack.c.h.b16 %v194
    %v273 = vunpack.c.l.b16 %v195
    %v274 = vunpack.c.h.b16 %v195
    %v275 = vunpack.c.l.b16 %v196
    %v276 = vunpack.c.h.b16 %v196
    %v277 = vunpack.c.l.b16 %v197
    %v278 = vunpack.c.h.b16 %v197
    %v279 = vunpack.c.l.b16 %v198
    %v280 = vunpack.c.h.b16 %v198
    %v281 = vunpack.c.l.b16 %v199
    %v282 = vunpack.c.h.b16 %v199
    %v283 = vunpack.c.l.b16 %v200
    %v284 = vunpack.c.h.b16 %v200
    %v285 = vunpack.c.l.b16 %v201
    %v286 = vunpack.c.h.b16 %v201
    %v287 = vunpack.c.l.b16 %v202
    %v288 = vunpack.c.h.b16 %v202
    %v289 = vunpack.c.l.b16 %v203
    %v290 = vunpack.c.h.b16 %v203
    %v291 = vunpack.c.l.b16 %v204
    %v292 = vunpack.c.h.b16 %v204
    %v293 = vunpack.c.l.b16 %v205
    %v294 = vunpack.c.h.b16 %v205
    %v295 = vunpack.c.l.b16 %v206
    %v296 = vunpack.c.h.b16 %v206
    %v297 = vunpack.c.l.b16 %v207
    %v298 = vunpack.c.h.b16 %v207
    %v299 = vunpack.c.l.b16 %v208
    %v300 = vunpack.c.h.b16 %v208
    %v301 = vunpack.c.l.b16 %v209
    %v302 = vunpack.c.h.b16 %v209
    %v303 = vunpack.c.l.b16 %v210
    %v304 = vunpack.c.h.b16 %v210
    %v305 = vunpack.c.l.b16 %v211
    %v306 = vunpack.c.h.b16 %v211
    %v307 = vunpack.c.l.b16 %v212
    %v308 = vunpack.c.h.b16 %v212
    %v309 = vunpack.c.l.b16 %v213
    %v310 = vunpack.c.h.b16 %v213
    %v311 = vunpack.c.l.b16 %v214
    %v312 = vunpack.c.h.b16 %v214
    %v313 = vunpack.c.l.b16 %v215
    %v314 = vunpack.c.h.b16 %v215
    %v315 = vunpack.c.l.b16 %v216
    %v316 = vunpack.c.h.b16 %v216
    %v317 = vunpack.c.l.b16 %v217
    %v318 = vunpack.c.h.b16 %v217
    %v319 = vunpack.c.l.b16 %v218
    %v320 = vunpack.c.h.b16 %v218
    %v321 = vunpack.c.l.b16 %v219
    %v322 = vunpack.c.h.b16 %v219
    %v323 = vunpack.c.l.b16 %v220
    %v324 = vunpack.c.h.b16 %v220
    %v325 = vunpack.c.l.b16 %v221
    %v326 = vunpack.c.h.b16 %v221
    %v327 = vunpack.c.l.b16 %v222
    %v328 = vunpack.c.h.b16 %v222
    %v329 = vunpack.c.l.b16 %v223
    %v330 = vunpack.c.h.b16 %v223
    %v331 = vunpack.c.l.b16 %v224
    %v332 = vunpack.c.h.b16 %v224
    %v333 = vpack.c.b16 %v271, %v269
    %v334 = vpack.c.b16 %v272, %v270
    %v335 = vpack.c.b16 %v275, %v273
    %v336 = vpack.c.b16 %v276, %v274
    %v337 = vpack.c.b16 %v279, %v277
    %v338 = vpack.c.b16 %v280, %v278
    %v339 = vpack.c.b16 %v283, %v281
    %v340 = vpack.c.b16 %v284, %v282
    %v341 = vpack.c.b16 %v287, %v285
    %v342 = vpack.c.b16 %v288, %v286
    %v343 = vpack.c.b16 %v291, %v289
    %v344 = vpack.c.b16 %v292, %v290
    %v345 = vpack.c.b16 %v295, %v293
    %v346 = vpack.c.b16 %v296, %v294
    %v347 = vpack.c.b16 %v299, %v297
    %v348 = vpack.c.b16 %v300, %v298
    %v349 = vpack.c.b16 %v303, %v301
    %v350 = vpack.c.b16 %v304, %v302
    %v351 = vpack.c.b16 %v307, %v305
    %v352 = vpack.c.b16 %v308, %v306
    %v353 = vpack.c.b16 %v311, %v309
    %v354 = vpack.c.b16 %v312, %v310
    %v355 = vpack.c.b16 %v315, %v313
    %v356 = vpack.c.b16 %v316, %v314
    %v357 = vpack.c.b16 %v319, %v317
    %v358 = vpack.c.b16 %v320, %v318
    %v359 = vpack.c.b16 %v323, %v321
    %v360 = vpack.c.b16 %v324, %v322
    %v361 = vpack.c.b16 %v327, %v325
    %v362 = vpack.c.b16 %v328, %v326
    %v363 = vpack.c.b16 %v331, %v329
    %v364 = vpack.c.b16 %v332, %v330
    %397 = vmatprep.subr.bf16.mxu0 %v334
    %398 = vmatpush1.bf16.msra.mxu0 %v333
    %399 = vmatprep.subr.bf16.mxu0 %v336
    %400 = vmatpush1.bf16.msra.mxu0 %v335
    %401 = vmatprep.subr.bf16.mxu0 %v338
    %402 = vmatpush1.bf16.msra.mxu0 %v337
    %403 = vmatprep.subr.bf16.mxu0 %v340
    %404 = vmatpush1.bf16.msra.mxu0 %v339
    %405 = vmatprep.subr.bf16.mxu0 %v342
    %406 = vmatpush1.bf16.msra.mxu0 %v341
    %407 = vmatprep.subr.bf16.mxu0 %v344
    %408 = vmatpush1.bf16.msra.mxu0 %v343
    %409 = vmatprep.subr.bf16.mxu0 %v346
    %410 = vmatpush1.bf16.msra.mxu0 %v345
    %411 = vmatprep.subr.bf16.mxu0 %v348
    %412 = vmatpush1.bf16.msra.mxu0 %v347
    %413 = vmatprep.subr.bf16.mxu0 %v350
    %414 = vmatpush1.bf16.msra.mxu0 %v349
    %415 = vmatprep.subr.bf16.mxu0 %v352
    %416 = vmatpush1.bf16.msra.mxu0 %v351
    %417 = vmatprep.subr.bf16.mxu0 %v354
    %418 = vmatpush1.bf16.msra.mxu0 %v353
    %419 = vmatprep.subr.bf16.mxu0 %v356
    %420 = vmatpush1.bf16.msra.mxu0 %v355
    %421 = vmatprep.subr.bf16.mxu0 %v358
    %422 = vmatpush1.bf16.msra.mxu0 %v357
    %423 = vmatprep.subr.bf16.mxu0 %v360
    %424 = vmatpush1.bf16.msra.mxu0 %v359
    %425 = vmatprep.subr.bf16.mxu0 %v362
    %426 = vmatpush1.bf16.msra.mxu0 %v361
    %427 = vmatprep.subr.bf16.mxu0 %v364
    %428 = vmatpush1.bf16.msra.mxu0 %v363
    %429 = vmatprep.mubr.bf16.mxu0 %v192
    %430 = vmatmul.mubr.bf16.gmra.mrb[0].mxu0 %v191
    %v431 = vpop.f32.mrb[0].mxu0
    %v432 = vadd.f32 %v230, %v431
    %v433 = vpop.f32.mrb[0].mxu0
    %v434 = vadd.f32 %v234, %v433
    %v435 = vpop.f32.mrb[0].mxu0
    %v436 = vpop.f32.mrb[0].mxu0
    %437 = vdwg.mxu0
    %v438 = vpack.c.bf16 %v432, %v432
    %v439 = vpack.c.bf16 %v434, %v434
    %v440 = vmul.bf16 %v438, %v438
    %v441 = vmul.bf16 %v439, %v439
    %v442 = vmul.bf16 %v438, %v440
    %v443 = vmul.bf16 %v439, %v441
    %v444 = vmul.bf16 %v442, 1027030327
    %v445 = vmul.bf16 %v443, 1027030327
    %v446 = vadd.bf16 %v438, %v444
    %v447 = vadd.bf16 %v439, %v445
    %v448 = vmul.bf16 %v446, 1061961548
    %v449 = vmul.bf16 %v447, 1061961548
    %v450 = vtanh.bf16.pop %v448
    %v451 = vtanh.bf16.pop %v449
    %v452 = vadd.bf16 %v450, 1065369472
    %v453 = vadd.bf16 %v451, 1065369472
    %v454 = vmul.bf16 %v452, 1056980736
    %v455 = vmul.bf16 %v453, 1056980736
    %v456 = vmul.bf16 %v438, %v454
    %v457 = vmul.bf16 %v439, %v455
    %v458 = vld [vmem:[#allocation7] sm:$0xff]
    %v459 = vld [vmem:[#allocation7 + $0x8] sm:$0xff]
    %v460 = vld [vmem:[#allocation7 + $0x10] sm:$0xff]
    %v461 = vld [vmem:[#allocation7 + $0x18] sm:$0xff]
    %v462 = vld [vmem:[#allocation7 + $0x20] sm:$0xff]
    %v463 = vld [vmem:[#allocation7 + $0x28] sm:$0xff]
    %v464 = vld [vmem:[#allocation7 + $0x30] sm:$0xff]
    %v465 = vld [vmem:[#allocation7 + $0x38] sm:$0xff]
    %v466 = vld [vmem:[#allocation7 + $0x40] sm:$0xff]
    %v467 = vld [vmem:[#allocation7 + $0x48] sm:$0xff]
    %v468 = vld [vmem:[#allocation7 + $0x50] sm:$0xff]
    %v469 = vld [vmem:[#allocation7 + $0x58] sm:$0xff]
    %v470 = vld [vmem:[#allocation7 + $0x60] sm:$0xff]
    %v471 = vld [vmem:[#allocation7 + $0x68] sm:$0xff]
    %v472 = vld [vmem:[#allocation7 + $0x70] sm:$0xff]
    %v473 = vld [vmem:[#allocation7 + $0x78] sm:$0xff]
    %v474 = vld [vmem:[#allocation7 + $0x80] sm:$0xff]
    %v475 = vld [vmem:[#allocation7 + $0x88] sm:$0xff]
    %v476 = vld [vmem:[#allocation7 + $0x90] sm:$0xff]
    %v477 = vld [vmem:[#allocation7 + $0x98] sm:$0xff]
    %v478 = vld [vmem:[#allocation7 + $0xa0] sm:$0xff]
    %v479 = vld [vmem:[#allocation7 + $0xa8] sm:$0xff]
    %v480 = vld [vmem:[#allocation7 + $0xb0] sm:$0xff]
    %v481 = vld [vmem:[#allocation7 + $0xb8] sm:$0xff]
    %v482 = vld [vmem:[#allocation7 + $0xc0] sm:$0xff]
    %v483 = vld [vmem:[#allocation7 + $0xc8] sm:$0xff]
    %v484 = vld [vmem:[#allocation7 + $0xd0] sm:$0xff]
    %v485 = vld [vmem:[#allocation7 + $0xd8] sm:$0xff]
    %v486 = vld [vmem:[#allocation7 + $0xe0] sm:$0xff]
    %v487 = vld [vmem:[#allocation7 + $0xe8] sm:$0xff]
    %v488 = vld [vmem:[#allocation7 + $0xf0] sm:$0xff]
    %v489 = vld [vmem:[#allocation7 + $0xf8] sm:$0xff]
    %v490 = vld [vmem:[%s6] sm:$0x3]
    %v492 = vlaneseq
    %v493 = vshrl.u32 %v492, 7
    %v494 = vsub.s32 0, %v493
    %v495 = vrot.slane %v490, %v494
    %v496 = vlaneseq
    %v497 = vshrl.u32 %v496, 7
    %v498 = vsub.s32 1, %v497
    %v499 = vrot.slane %v490, %v498
    %v534 = vunpack.c.l.b16 %v458
    %v535 = vunpack.c.h.b16 %v458
    %v536 = vunpack.c.l.b16 %v459
    %v537 = vunpack.c.h.b16 %v459
    %v538 = vunpack.c.l.b16 %v460
    %v539 = vunpack.c.h.b16 %v460
    %v540 = vunpack.c.l.b16 %v461
    %v541 = vunpack.c.h.b16 %v461
    %v542 = vunpack.c.l.b16 %v462
    %v543 = vunpack.c.h.b16 %v462
    %v544 = vunpack.c.l.b16 %v463
    %v545 = vunpack.c.h.b16 %v463
    %v546 = vunpack.c.l.b16 %v464
    %v547 = vunpack.c.h.b16 %v464
    %v548 = vunpack.c.l.b16 %v465
    %v549 = vunpack.c.h.b16 %v465
    %v550 = vunpack.c.l.b16 %v466
    %v551 = vunpack.c.h.b16 %v466
    %v552 = vunpack.c.l.b16 %v467
    %v553 = vunpack.c.h.b16 %v467
    %v554 = vunpack.c.l.b16 %v468
    %v555 = vunpack.c.h.b16 %v468
    %v556 = vunpack.c.l.b16 %v469
    %v557 = vunpack.c.h.b16 %v469
    %v558 = vunpack.c.l.b16 %v470
    %v559 = vunpack.c.h.b16 %v470
    %v560 = vunpack.c.l.b16 %v471
    %v561 = vunpack.c.h.b16 %v471
    %v562 = vunpack.c.l.b16 %v472
    %v563 = vunpack.c.h.b16 %v472
    %v564 = vunpack.c.l.b16 %v473
    %v565 = vunpack.c.h.b16 %v473
    %v566 = vunpack.c.l.b16 %v474
    %v567 = vunpack.c.h.b16 %v474
    %v568 = vunpack.c.l.b16 %v475
    %v569 = vunpack.c.h.b16 %v475
    %v570 = vunpack.c.l.b16 %v476
    %v571 = vunpack.c.h.b16 %v476
    %v572 = vunpack.c.l.b16 %v477
    %v573 = vunpack.c.h.b16 %v477
    %v574 = vunpack.c.l.b16 %v478
    %v575 = vunpack.c.h.b16 %v478
    %v576 = vunpack.c.l.b16 %v479
    %v577 = vunpack.c.h.b16 %v479
    %v578 = vunpack.c.l.b16 %v480
    %v579 = vunpack.c.h.b16 %v480
    %v580 = vunpack.c.l.b16 %v481
    %v581 = vunpack.c.h.b16 %v481
    %v582 = vunpack.c.l.b16 %v482
    %v583 = vunpack.c.h.b16 %v482
    %v584 = vunpack.c.l.b16 %v483
    %v585 = vunpack.c.h.b16 %v483
    %v586 = vunpack.c.l.b16 %v484
    %v587 = vunpack.c.h.b16 %v484
    %v588 = vunpack.c.l.b16 %v485
    %v589 = vunpack.c.h.b16 %v485
    %v590 = vunpack.c.l.b16 %v486
    %v591 = vunpack.c.h.b16 %v486
    %v592 = vunpack.c.l.b16 %v487
    %v593 = vunpack.c.h.b16 %v487
    %v594 = vunpack.c.l.b16 %v488
    %v595 = vunpack.c.h.b16 %v488
    %v596 = vunpack.c.l.b16 %v489
    %v597 = vunpack.c.h.b16 %v489
    %v598 = vpack.c.b16 %v536, %v534
    %v599 = vpack.c.b16 %v537, %v535
    %v600 = vpack.c.b16 %v540, %v538
    %v601 = vpack.c.b16 %v541, %v539
    %v602 = vpack.c.b16 %v544, %v542
    %v603 = vpack.c.b16 %v545, %v543
    %v604 = vpack.c.b16 %v548, %v546
    %v605 = vpack.c.b16 %v549, %v547
    %v606 = vpack.c.b16 %v552, %v550
    %v607 = vpack.c.b16 %v553, %v551
    %v608 = vpack.c.b16 %v556, %v554
    %v609 = vpack.c.b16 %v557, %v555
    %v610 = vpack.c.b16 %v560, %v558
    %v611 = vpack.c.b16 %v561, %v559
    %v612 = vpack.c.b16 %v564, %v562
    %v613 = vpack.c.b16 %v565, %v563
    %v614 = vpack.c.b16 %v568, %v566
    %v615 = vpack.c.b16 %v569, %v567
    %v616 = vpack.c.b16 %v572, %v570
    %v617 = vpack.c.b16 %v573, %v571
    %v618 = vpack.c.b16 %v576, %v574
    %v619 = vpack.c.b16 %v577, %v575
    %v620 = vpack.c.b16 %v580, %v578
    %v621 = vpack.c.b16 %v581, %v579
    %v622 = vpack.c.b16 %v584, %v582
    %v623 = vpack.c.b16 %v585, %v583
    %v624 = vpack.c.b16 %v588, %v586
    %v625 = vpack.c.b16 %v589, %v587
    %v626 = vpack.c.b16 %v592, %v590
    %v627 = vpack.c.b16 %v593, %v591
    %v628 = vpack.c.b16 %v596, %v594
    %v629 = vpack.c.b16 %v597, %v595
    %662 = vmatprep.subr.bf16.mxu0 %v599
    %663 = vmatpush1.bf16.msra.mxu0 %v598
    %664 = vmatprep.subr.bf16.mxu0 %v601
    %665 = vmatpush1.bf16.msra.mxu0 %v600
    %666 = vmatprep.subr.bf16.mxu0 %v603
    %667 = vmatpush1.bf16.msra.mxu0 %v602
    %668 = vmatprep.subr.bf16.mxu0 %v605
    %669 = vmatpush1.bf16.msra.mxu0 %v604
    %670 = vmatprep.subr.bf16.mxu0 %v607
    %671 = vmatpush1.bf16.msra.mxu0 %v606
    %672 = vmatprep.subr.bf16.mxu0 %v609
    %673 = vmatpush1.bf16.msra.mxu0 %v608
    %674 = vmatprep.subr.bf16.mxu0 %v611
    %675 = vmatpush1.bf16.msra.mxu0 %v610
    %676 = vmatprep.subr.bf16.mxu0 %v613
    %677 = vmatpush1.bf16.msra.mxu0 %v612
    %678 = vmatprep.subr.bf16.mxu0 %v615
    %679 = vmatpush1.bf16.msra.mxu0 %v614
    %680 = vmatprep.subr.bf16.mxu0 %v617
    %681 = vmatpush1.bf16.msra.mxu0 %v616
    %682 = vmatprep.subr.bf16.mxu0 %v619
    %683 = vmatpush1.bf16.msra.mxu0 %v618
    %684 = vmatprep.subr.bf16.mxu0 %v621
    %685 = vmatpush1.bf16.msra.mxu0 %v620
    %686 = vmatprep.subr.bf16.mxu0 %v623
    %687 = vmatpush1.bf16.msra.mxu0 %v622
    %688 = vmatprep.subr.bf16.mxu0 %v625
    %689 = vmatpush1.bf16.msra.mxu0 %v624
    %690 = vmatprep.subr.bf16.mxu0 %v627
    %691 = vmatpush1.bf16.msra.mxu0 %v626
    %692 = vmatprep.subr.bf16.mxu0 %v629
    %693 = vmatpush1.bf16.msra.mxu0 %v628
    %694 = vmatprep.mubr.bf16.mxu0 %v457
    %695 = vmatmul.mubr.bf16.gmra.mrb[0].mxu0 %v456
    %v696 = vpop.f32.mrb[0].mxu0
    %v697 = vadd.f32 %v495, %v696
    %v698 = vpop.f32.mrb[0].mxu0
    %v699 = vadd.f32 %v499, %v698
    %v700 = vpop.f32.mrb[0].mxu0
    %v701 = vpop.f32.mrb[0].mxu0
    %702 = vdwg.mxu0
    %v703 = vpack.c.bf16 %v697, %v697
    %v704 = vpack.c.bf16 %v699, %v699
    %v705 = vmul.bf16 %v703, %v703
    %v706 = vmul.bf16 %v704, %v704
    %v707 = vmul.bf16 %v703, %v705
    %v708 = vmul.bf16 %v704, %v706
    %v709 = vmul.bf16 %v707, 1027030327
    %v710 = vmul.bf16 %v708, 1027030327
    %v711 = vadd.bf16 %v703, %v709
    %v712 = vadd.bf16 %v704, %v710
    %v713 = vmul.bf16 %v711, 1061961548
    %v714 = vmul.bf16 %v712, 1061961548
    %v715 = vtanh.bf16.pop %v713
    %v716 = vtanh.bf16.pop %v714
    %v717 = vadd.bf16 %v715, 1065369472
    %v718 = vadd.bf16 %v716, 1065369472
    %v719 = vmul.bf16 %v717, 1056980736
    %v720 = vmul.bf16 %v718, 1056980736
    %v721 = vmul.bf16 %v703, %v719
    %v722 = vmul.bf16 %v704, %v720
    %v723 = vld [vmem:[#allocation9] sm:$0xf]
    %v724 = vld [vmem:[#allocation9 + $0x4] sm:$0xf]
    %v725 = vld [vmem:[#allocation9 + $0x8] sm:$0xf]
    %v726 = vld [vmem:[#allocation9 + $0xc] sm:$0xf]
    %v727 = vld [vmem:[#allocation9 + $0x10] sm:$0xf]
    %v728 = vld [vmem:[#allocation9 + $0x14] sm:$0xf]
    %v729 = vld [vmem:[#allocation9 + $0x18] sm:$0xf]
    %v730 = vld [vmem:[#allocation9 + $0x1c] sm:$0xf]
    %v731 = vld [vmem:[#allocation9 + $0x20] sm:$0xf]
    %v732 = vld [vmem:[#allocation9 + $0x24] sm:$0xf]
    %v733 = vld [vmem:[#allocation9 + $0x28] sm:$0xf]
    %v734 = vld [vmem:[#allocation9 + $0x2c] sm:$0xf]
    %v735 = vld [vmem:[#allocation9 + $0x30] sm:$0xf]
    %v736 = vld [vmem:[#allocation9 + $0x34] sm:$0xf]
    %v737 = vld [vmem:[#allocation9 + $0x38] sm:$0xf]
    %v738 = vld [vmem:[#allocation9 + $0x3c] sm:$0xf]
    %v739 = vld [vmem:[#allocation9 + $0x40] sm:$0xf]
    %v740 = vld [vmem:[#allocation9 + $0x44] sm:$0xf]
    %v741 = vld [vmem:[#allocation9 + $0x48] sm:$0xf]
    %v742 = vld [vmem:[#allocation9 + $0x4c] sm:$0xf]
    %v743 = vld [vmem:[#allocation9 + $0x50] sm:$0xf]
    %v744 = vld [vmem:[#allocation9 + $0x54] sm:$0xf]
    %v745 = vld [vmem:[#allocation9 + $0x58] sm:$0xf]
    %v746 = vld [vmem:[#allocation9 + $0x5c] sm:$0xf]
    %v747 = vld [vmem:[#allocation9 + $0x60] sm:$0xf]
    %v748 = vld [vmem:[#allocation9 + $0x64] sm:$0xf]
    %v749 = vld [vmem:[#allocation9 + $0x68] sm:$0xf]
    %v750 = vld [vmem:[#allocation9 + $0x6c] sm:$0xf]
    %v751 = vld [vmem:[#allocation9 + $0x70] sm:$0xf]
    %v752 = vld [vmem:[#allocation9 + $0x74] sm:$0xf]
    %v753 = vld [vmem:[#allocation9 + $0x78] sm:$0xf]
    %v754 = vld [vmem:[#allocation9 + $0x7c] sm:$0xf]
    %v755 = vld [vmem:[%s8] sm:$0x1]
    %v757 = vlaneseq
    %v758 = vshrl.u32 %v757, 7
    %v759 = vsub.s32 0, %v758
    %v760 = vrot.slane %v755, %v759
    %v794 = vunpack.c.l.b16 %v723
    %v795 = vunpack.c.l.b16 %v724
    %v796 = vunpack.c.l.b16 %v725
    %v797 = vunpack.c.l.b16 %v726
    %v798 = vunpack.c.l.b16 %v727
    %v799 = vunpack.c.l.b16 %v728
    %v800 = vunpack.c.l.b16 %v729
    %v801 = vunpack.c.l.b16 %v730
    %v802 = vunpack.c.l.b16 %v731
    %v803 = vunpack.c.l.b16 %v732
    %v804 = vunpack.c.l.b16 %v733
    %v805 = vunpack.c.l.b16 %v734
    %v806 = vunpack.c.l.b16 %v735
    %v807 = vunpack.c.l.b16 %v736
    %v808 = vunpack.c.l.b16 %v737
    %v809 = vunpack.c.l.b16 %v738
    %v810 = vunpack.c.l.b16 %v739
    %v811 = vunpack.c.l.b16 %v740
    %v812 = vunpack.c.l.b16 %v741
    %v813 = vunpack.c.l.b16 %v742
    %v814 = vunpack.c.l.b16 %v743
    %v815 = vunpack.c.l.b16 %v744
    %v816 = vunpack.c.l.b16 %v745
    %v817 = vunpack.c.l.b16 %v746
    %v818 = vunpack.c.l.b16 %v747
    %v819 = vunpack.c.l.b16 %v748
    %v820 = vunpack.c.l.b16 %v749
    %v821 = vunpack.c.l.b16 %v750
    %v822 = vunpack.c.l.b16 %v751
    %v823 = vunpack.c.l.b16 %v752
    %v824 = vunpack.c.l.b16 %v753
    %v825 = vunpack.c.l.b16 %v754
    %v826 = vpack.c.b16 %v795, %v794
    %v827 = vpack.c.b16 %v797, %v796
    %v828 = vpack.c.b16 %v799, %v798
    %v829 = vpack.c.b16 %v801, %v800
    %v830 = vpack.c.b16 %v803, %v802
    %v831 = vpack.c.b16 %v805, %v804
    %v832 = vpack.c.b16 %v807, %v806
    %v833 = vpack.c.b16 %v809, %v808
    %v834 = vpack.c.b16 %v811, %v810
    %v835 = vpack.c.b16 %v813, %v812
    %v836 = vpack.c.b16 %v815, %v814
    %v837 = vpack.c.b16 %v817, %v816
    %v838 = vpack.c.b16 %v819, %v818
    %v839 = vpack.c.b16 %v821, %v820
    %v840 = vpack.c.b16 %v823, %v822
    %v841 = vpack.c.b16 %v825, %v824
    %858 = vmatprep.subr.bf16.mxu0 0
    %859 = vmatpush1.bf16.msra.mxu0 %v826
    %860 = vmatprep.subr.bf16.mxu0 0
    %861 = vmatpush1.bf16.msra.mxu0 %v827
    %862 = vmatprep.subr.bf16.mxu0 0
    %863 = vmatpush1.bf16.msra.mxu0 %v828
    %864 = vmatprep.subr.bf16.mxu0 0
    %865 = vmatpush1.bf16.msra.mxu0 %v829
    %866 = vmatprep.subr.bf16.mxu0 0
    %867 = vmatpush1.bf16.msra.mxu0 %v830
    %868 = vmatprep.subr.bf16.mxu0 0
    %869 = vmatpush1.bf16.msra.mxu0 %v831
    %870 = vmatprep.subr.bf16.mxu0 0
    %871 = vmatpush1.bf16.msra.mxu0 %v832
    %872 = vmatprep.subr.bf16.mxu0 0
    %873 = vmatpush1.bf16.msra.mxu0 %v833
    %874 = vmatprep.subr.bf16.mxu0 0
    %875 = vmatpush1.bf16.msra.mxu0 %v834
    %876 = vmatprep.subr.bf16.mxu0 0
    %877 = vmatpush1.bf16.msra.mxu0 %v835
    %878 = vmatprep.subr.bf16.mxu0 0
    %879 = vmatpush1.bf16.msra.mxu0 %v836
    %880 = vmatprep.subr.bf16.mxu0 0
    %881 = vmatpush1.bf16.msra.mxu0 %v837
    %882 = vmatprep.subr.bf16.mxu0 0
    %883 = vmatpush1.bf16.msra.mxu0 %v838
    %884 = vmatprep.subr.bf16.mxu0 0
    %885 = vmatpush1.bf16.msra.mxu0 %v839
    %886 = vmatprep.subr.bf16.mxu0 0
    %887 = vmatpush1.bf16.msra.mxu0 %v840
    %888 = vmatprep.subr.bf16.mxu0 0
    %889 = vmatpush1.bf16.msra.mxu0 %v841
    %890 = vmatprep.mubr.bf16.mxu0 %v722
    %891 = vmatmul.mubr.bf16.gmra.mrb[0].mxu0 %v721
    %v892 = vpop.f32.mrb[0].mxu0
    %v893 = vadd.f32 %v760, %v892
    %v894 = vpop.f32.mrb[0].mxu0
    %v895 = vpop.f32.mrb[0].mxu0
    %v896 = vpop.f32.mrb[0].mxu0
    %897 = vdwg.mxu0
    %vm898 = vcmask 31744
    %899 = vst.msk [vmem:[%s9] sm:$0xff] %vm898, %v893
    // Predicated region
    $region58: #{tpu_custom_call.1} parent=1 // pred_check
      _
    $region59: #{tpu_custom_call.1} parent=1 // pred_check_branch
      %901 = sbr.rel (0) target = $region61
    $region60: #{tpu_custom_call.1} parent=1 // pred_region
      _
    $region61: #{tpu_custom_call.1} parent=1 // pred_fallthru
      _
    // Predicated region
    $region62: #{tpu_custom_call.1} parent=1 // pred_check
      _
    $region63: #{tpu_custom_call.1} parent=1 // pred_check_branch
      %903 = sbr.rel (0) target = $region65
    $region64: #{tpu_custom_call.1} parent=1 // pred_region
      _
    $region65: #{tpu_custom_call.1} parent=1 // pred_fallthru
      _
    %904 = vsyncpa [#allocation3], 1
    %905 = vsyncpa [#allocation5], 1
    %906 = vsyncpa [#allocation8], 1

</llo_original>
